<compile_context>
chip_gen: v7x
topology: tpu7x:2x2x1
jax: 0.10.0
libtpu: 0.0.40
codegen_flags: <defaults>
</compile_context>

<pallas_src>
import functools

import jax
import jax.numpy as jnp
from jax import lax
from jax.experimental import pallas as pl
from jax.experimental.pallas import tpu as pltpu


_BN_EPS = 1e-5


# ----------------------------- hidden layers ---------------------------------

def _hidden_body(noise_ref, embp_ref,
                 w1_ref, b1_ref, g1_ref, be1_ref,
                 w2_ref, b2_ref, g2_ref, be2_ref,
                 w3_ref, b3_ref, g3_ref, be3_ref):
    """Layers 1-3: Linear -> LeakyReLU(0.2) -> BatchNorm1d (batch stats)."""
    inv_b = 1.0 / noise_ref.shape[0]

    def lrelu(h):
        # one vmul + vmax instead of cmp + select
        return jnp.maximum(h, 0.2 * h)

    def batchnorm(h, g_ref, be_ref):
        # single pass E[x], E[x^2]; clamp var >= 0 (f32 cancellation safety);
        # fold affine into scale/shift; rsqrt -> EUP slot.
        mean = jnp.sum(h, axis=0, keepdims=True) * inv_b
        meansq = jnp.sum(h * h, axis=0, keepdims=True) * inv_b
        var = jnp.maximum(meansq - mean * mean, 0.0)
        scale = g_ref[...] * lax.rsqrt(var + _BN_EPS)
        shift = be_ref[...] - mean * scale
        return h * scale + shift

    def dense(h, w_ref, b_ref):
        # bf16 MXU operands, f32 accumulate; bias add in f32
        return jnp.dot(h.astype(jnp.bfloat16), w_ref[...],
                       preferred_element_type=jnp.float32) + b_ref[...]

    # layer 1: concat eliminated -> noise @ W1a + (emb @ W1b)[labels] (prefolded)
    h = (jnp.dot(noise_ref[...].astype(jnp.bfloat16), w1_ref[...],
                 preferred_element_type=jnp.float32)
         + embp_ref[...] + b1_ref[...])
    h = batchnorm(lrelu(h), g1_ref, be1_ref)
    h = batchnorm(lrelu(dense(h, w2_ref, b2_ref)), g2_ref, be2_ref)
    h = batchnorm(lrelu(dense(h, w3_ref, b3_ref)), g3_ref, be3_ref)
    return h


# ------------------ fused kernel (v5e / v6e, single TC) ----------------------

def _fused_kernel(noise_ref, embp_ref,
                  w1_ref, b1_ref, g1_ref, be1_ref,
                  w2_ref, b2_ref, g2_ref, be2_ref,
                  w3_ref, b3_ref, g3_ref, be3_ref,
                  w4_ref, b4_ref,
                  out_ref, h3_ref):
    # hidden layers run once (grid axis is "arbitrary", scratch persists)
    @pl.when(pl.program_id(0) == 0)
    def _():
        h = _hidden_body(noise_ref, embp_ref,
                         w1_ref, b1_ref, g1_ref, be1_ref,
                         w2_ref, b2_ref, g2_ref, be2_ref,
                         w3_ref, b3_ref, g3_ref, be3_ref)
        h3_ref[...] = h.astype(jnp.bfloat16)

    acc = jnp.dot(h3_ref[...], w4_ref[...], preferred_element_type=jnp.float32)
    out_ref[...] = jnp.tanh(acc + b4_ref[...])


# ---------------- split kernels (v7x, keep layer 4 "parallel") ---------------

def _hidden_kernel(noise_ref, embp_ref,
                   w1_ref, b1_ref, g1_ref, be1_ref,
                   w2_ref, b2_ref, g2_ref, be2_ref,
                   w3_ref, b3_ref, g3_ref, be3_ref,
                   h3_ref):
    h = _hidden_body(noise_ref, embp_ref,
                     w1_ref, b1_ref, g1_ref, be1_ref,
                     w2_ref, b2_ref, g2_ref, be2_ref,
                     w3_ref, b3_ref, g3_ref, be3_ref)
    h3_ref[...] = h.astype(jnp.bfloat16)


def _output_kernel(h3_ref, w4_ref, b4_ref, out_ref):
    acc = jnp.dot(h3_ref[...], w4_ref[...], preferred_element_type=jnp.float32)
    out_ref[...] = jnp.tanh(acc + b4_ref[...])


# ------------------------------- helpers --------------------------------------

@functools.lru_cache(maxsize=None)
def _is_v7x():
    try:
        return "v7" in jax.devices()[0].device_kind.lower()
    except Exception:  # pragma: no cover - conservative default
        return False


def _full_spec(arr):
    """Full-array block with a constant index map (DMA'd once across the grid)."""
    shape = tuple(arr.shape)
    nd = len(shape)
    return pl.BlockSpec(shape, lambda j, _nd=nd: (0,) * _nd)


def _pick_tn(n_pad, H3, B, vmem_limit, min_tiles):
    """Largest 128-multiple divisor of n_pad whose double-buffered tiles fit."""
    budget = vmem_limit // 2          # leave headroom for resident params/scratch
    tn = n_pad
    while tn >= 128:
        if n_pad % tn == 0 and (n_pad // tn) >= min_tiles:
            tile_bytes = 2 * (H3 * tn * 2 + tn * 4 + B * tn * 4)
            if tile_bytes <= budget:
                return tn
        tn -= 128
    return 128


# ----------------------- hoisted constant preparation -------------------------

def prepare_params(params, *, noise_dim, img_channels, img_size):
    """One-time prep: w1 split, embedding pre-fold, lane-dense padding of w4/b4."""
    out_dim = img_channels * img_size * img_size
    n_pad = ((out_dim + 127) // 128) * 128

    w1 = params["w1"]                                    # bf16 (noise_dim + C, H1)
    w1a = w1[:noise_dim]                                 # (noise_dim, H1)
    w1b = w1[noise_dim:]                                 # (C, H1)
    emb_tbl = jnp.dot(params["emb"].astype(jnp.bfloat16), w1b,
                      preferred_element_type=jnp.float32)  # (C, H1) f32

    pad = n_pad - out_dim
    w4p = jnp.pad(params["w4"], ((0, 0), (0, pad)))      # bf16 (H3, n_pad)
    b4p = jnp.pad(params["b4"], ((0, 0), (0, pad)))      # f32  (1, n_pad)

    prepared = dict(params)
    prepared.update(w1a=w1a, emb_tbl=emb_tbl, w4p=w4p, b4p=b4p)
    return prepared


# --------------------------------- wrapper -------------------------------------

def generator_forward(noise, labels, p, *, noise_dim, img_channels, img_size):
    """noise: (B, noise_dim) f32, labels: (B,) int32 -> (B, C, H, W) f32."""
    del noise_dim  # layer-1 split is pre-baked into p["w1a"] / p["emb_tbl"]
    B = noise.shape[0]
    out_dim = img_channels * img_size * img_size
    n_pad = p["w4p"].shape[1]

    H1 = p["w1a"].shape[1]
    H2 = p["w2"].shape[1]
    H3 = p["w3"].shape[1]

    # per-call: only the (B, H1) table gather (cheap XLA gather on labels)
    embp = p["emb_tbl"][labels]

    is_v7 = _is_v7x()
    # v7x has only 64 MiB physical VMEM per TC -> leave headroom; v5e/v6e: 128 MiB.
    vmem_limit = (32 if is_v7 else 64) * 1024 * 1024
    min_tiles = min(4, n_pad // 128) if is_v7 else 1   # keep both v7x cores busy
    tn = _pick_tn(n_pad, H3, B, vmem_limit, min_tiles)
    grid = (n_pad // tn,)

    hidden_args = (noise, embp,
                   p["w1a"], p["b1"], p["g1"], p["be1"],
                   p["w2"], p["b2"], p["g2"], p["be2"],
                   p["w3"], p["b3"], p["g3"], p["be3"])

    flops_hidden = 2 * B * (p["w1a"].shape[0] * H1 + H1 * H2 + H2 * H3)
    trans_hidden = H1 + H2 + H3                       # rsqrt per BN feature
    bytes_hidden = sum(int(a.size) * a.dtype.itemsize for a in hidden_args)
    flops_out = 2 * B * H3 * n_pad
    trans_out = B * n_pad                             # tanh
    bytes_out = H3 * n_pad * 2 + n_pad * 4 + B * n_pad * 4

    w4_spec = pl.BlockSpec((H3, tn), lambda j: (0, j))
    b4_spec = pl.BlockSpec((1, tn), lambda j: (0, j))
    out_spec = pl.BlockSpec((B, tn), lambda j: (0, j))

    if not is_v7:
        # ---- single fused kernel: hidden layers on step 0, tiled layer 4 ----
        out_pad = pl.pallas_call(
            _fused_kernel,
            out_shape=jax.ShapeDtypeStruct((B, n_pad), jnp.float32),
            grid_spec=pltpu.PrefetchScalarGridSpec(
                num_scalar_prefetch=0,
                grid=grid,
                in_specs=[_full_spec(a) for a in hidden_args]
                         + [w4_spec, b4_spec],
                out_specs=out_spec,
                scratch_shapes=[pltpu.VMEM((B, H3), jnp.bfloat16)]),
            compiler_params=pltpu.CompilerParams(
                # must be "arbitrary": step 0 initializes the persistent scratch
                dimension_semantics=("arbitrary",),
                vmem_limit_bytes=vmem_limit),
            cost_estimate=pl.CostEstimate(
                flops=flops_hidden + flops_out,
                transcendentals=trans_hidden + trans_out,
                bytes_accessed=bytes_hidden + bytes_out + B * n_pad * 4),
        )(*hidden_args, p["w4p"], p["b4p"])
    else:
        # ---- v7x: two kernels so layer 4 stays "parallel" across both TCs ----
        vmem = pl.BlockSpec(memory_space=pltpu.MemorySpace.VMEM)
        h3 = pl.pallas_call(
            _hidden_kernel,
            out_shape=jax.ShapeDtypeStruct((B, H3), jnp.bfloat16),
            in_specs=[vmem] * len(hidden_args),
            out_specs=vmem,
            compiler_params=pltpu.CompilerParams(vmem_limit_bytes=vmem_limit),
            cost_estimate=pl.CostEstimate(flops=flops_hidden,
                                          transcendentals=trans_hidden,
                                          bytes_accessed=bytes_hidden + B * H3 * 2),
        )(*hidden_args)

        out_pad = pl.pallas_call(
            _output_kernel,
            out_shape=jax.ShapeDtypeStruct((B, n_pad), jnp.float32),
            grid_spec=pltpu.PrefetchScalarGridSpec(
                num_scalar_prefetch=0,
                grid=grid,
                in_specs=[pl.BlockSpec((B, H3), lambda j: (0, 0)),
                          w4_spec, b4_spec],
                out_specs=out_spec),
            compiler_params=pltpu.CompilerParams(
                dimension_semantics=("parallel",),
                vmem_limit_bytes=vmem_limit),
            cost_estimate=pl.CostEstimate(flops=flops_out,
                                          transcendentals=trans_out,
                                          bytes_accessed=B * H3 * 2 + bytes_out),
        )(h3, p["w4p"], p["b4p"])

    return out_pad[:, :out_dim].reshape(B, img_channels, img_size, img_size)


# --------------------------- deterministic init --------------------------------

def init_params(key, noise_dim, num_classes, img_channels, img_size, hidden_dim):
    input_dim = noise_dim + num_classes
    out_dim = img_channels * img_size * img_size
    dims = [(input_dim, hidden_dim),
            (hidden_dim, hidden_dim * 2),
            (hidden_dim * 2, hidden_dim * 4),
            (hidden_dim * 4, out_dim)]

    keys = jax.random.split(key, 1 + 2 * len(dims))
    params = {"emb": jax.random.normal(keys[0], (num_classes, num_classes),
                                       jnp.float32)}
    for i, (fan_in, fan_out) in enumerate(dims, start=1):
        bound = 1.0 / jnp.sqrt(fan_in)
        # stored transposed (in, out) so kernels do x @ W; weights in bf16
        w = jax.random.uniform(keys[2 * i - 1], (fan_in, fan_out),
                               jnp.float32, -bound, bound)
        params[f"w{i}"] = w.astype(jnp.bfloat16)
        params[f"b{i}"] = jax.random.uniform(keys[2 * i], (1, fan_out),
                                             jnp.float32, -bound, bound)
        if i < 4:  # BN after first three Linear layers only
            params[f"g{i}"] = jnp.ones((1, fan_out), jnp.float32)
            params[f"be{i}"] = jnp.zeros((1, fan_out), jnp.float32)
    return params


# ----------------------------- JAX reference -----------------------------------

def reference_forward(noise, labels, p, *, img_channels, img_size):
    embed = p["emb"][labels]
    x = jnp.concatenate([noise, embed], axis=1)

    def dense(h, i):
        return jnp.dot(h.astype(jnp.bfloat16), p[f"w{i}"],
                       preferred_element_type=jnp.float32) + p[f"b{i}"]

    def block(h, i):
        h = dense(h, i)
        h = jnp.where(h > 0, h, 0.2 * h)
        mean = h.mean(0, keepdims=True)
        var = ((h - mean) ** 2).mean(0, keepdims=True)
        return p[f"g{i}"] * (h - mean) / jnp.sqrt(var + _BN_EPS) + p[f"be{i}"]

    h = block(x, 1)
    h = block(h, 2)
    h = block(h, 3)
    # intentional precision choice: the kernel feeds layer 4 a bf16 h3
    h = h.astype(jnp.bfloat16).astype(jnp.float32)
    out = jnp.tanh(dense(h, 4))
    return out.reshape(noise.shape[0], img_channels, img_size, img_size)


# ----------------------------------- main ---------------------------------------

if __name__ == "__main__":
    # small config consistent with the module's structure
    NOISE_DIM, NUM_CLASSES = 16, 8
    IMG_CHANNELS, IMG_SIZE, HIDDEN = 1, 8, 32
    B = 8

    key = jax.random.PRNGKey(0)
    k_noise, k_labels, k_params = jax.random.split(key, 3)

    noise = jax.random.normal(k_noise, (B, NOISE_DIM), jnp.float32)
    labels = jax.random.randint(k_labels, (B,), 0, NUM_CLASSES, jnp.int32)
    params = init_params(k_params, NOISE_DIM, NUM_CLASSES,
                         IMG_CHANNELS, IMG_SIZE, HIDDEN)
    # hoisted constant prep (runs once, not per forward call)
    prepared = prepare_params(params, noise_dim=NOISE_DIM,
                              img_channels=IMG_CHANNELS, img_size=IMG_SIZE)

    fwd = jax.jit(functools.partial(generator_forward,
                                    noise_dim=NOISE_DIM,
                                    img_channels=IMG_CHANNELS,
                                    img_size=IMG_SIZE))
    img = fwd(noise, labels, prepared)
    jax.block_until_ready(img)

    ref = reference_forward(noise, labels, params,
                            img_channels=IMG_CHANNELS, img_size=IMG_SIZE)
    assert img.shape == (B, IMG_CHANNELS, IMG_SIZE, IMG_SIZE)
    max_diff = float(jnp.max(jnp.abs(img - ref)))
    assert jnp.allclose(img, ref, atol=2e-2, rtol=2e-2), max_diff

    print("KERNEL_OK")
</pallas_src>

<mosaic_0001>
module attributes {stable_mosaic.version = 11 : i64} {
  func.func @_fused_kernel(%arg0: i32, %arg1: memref<8x16xf32, #tpu.memory_space<vmem>>, %arg2: memref<8x32xf32, #tpu.memory_space<vmem>>, %arg3: memref<16x32xbf16, #tpu.memory_space<vmem>>, %arg4: memref<1x32xf32, #tpu.memory_space<vmem>>, %arg5: memref<1x32xf32, #tpu.memory_space<vmem>>, %arg6: memref<1x32xf32, #tpu.memory_space<vmem>>, %arg7: memref<32x64xbf16, #tpu.memory_space<vmem>>, %arg8: memref<1x64xf32, #tpu.memory_space<vmem>>, %arg9: memref<1x64xf32, #tpu.memory_space<vmem>>, %arg10: memref<1x64xf32, #tpu.memory_space<vmem>>, %arg11: memref<64x128xbf16, #tpu.memory_space<vmem>>, %arg12: memref<1x128xf32, #tpu.memory_space<vmem>>, %arg13: memref<1x128xf32, #tpu.memory_space<vmem>>, %arg14: memref<1x128xf32, #tpu.memory_space<vmem>>, %arg15: memref<128x128xbf16, #tpu.memory_space<vmem>>, %arg16: memref<1x128xf32, #tpu.memory_space<vmem>>, %arg17: memref<8x128xf32, #tpu.memory_space<vmem>>, %arg18: memref<8x128xbf16, #tpu.memory_space<vmem>>) attributes {dimension_semantics = [#tpu.dimension_semantics<arbitrary>], iteration_bounds = array<i64: 1>, scalar_prefetch = 0 : i64, scratch_operands = 1 : i64, tpu.core_type = #tpu.core_type<tc>, window_params = [{pipeline_mode = #tpu.pipeline_mode<synchronous>, transform_indices = @transform_0, window_bounds = array<i64: 8, 16>}, {pipeline_mode = #tpu.pipeline_mode<synchronous>, transform_indices = @transform_1, window_bounds = array<i64: 8, 32>}, {pipeline_mode = #tpu.pipeline_mode<synchronous>, transform_indices = @transform_2, window_bounds = array<i64: 16, 32>}, {pipeline_mode = #tpu.pipeline_mode<synchronous>, transform_indices = @transform_3, window_bounds = array<i64: 1, 32>}, {pipeline_mode = #tpu.pipeline_mode<synchronous>, transform_indices = @transform_4, window_bounds = array<i64: 1, 32>}, {pipeline_mode = #tpu.pipeline_mode<synchronous>, transform_indices = @transform_5, window_bounds = array<i64: 1, 32>}, {pipeline_mode = #tpu.pipeline_mode<synchronous>, transform_indices = @transform_6, window_bounds = array<i64: 32, 64>}, {pipeline_mode = #tpu.pipeline_mode<synchronous>, transform_indices = @transform_7, window_bounds = array<i64: 1, 64>}, {pipeline_mode = #tpu.pipeline_mode<synchronous>, transform_indices = @transform_8, window_bounds = array<i64: 1, 64>}, {pipeline_mode = #tpu.pipeline_mode<synchronous>, transform_indices = @transform_9, window_bounds = array<i64: 1, 64>}, {pipeline_mode = #tpu.pipeline_mode<synchronous>, transform_indices = @transform_10, window_bounds = array<i64: 64, 128>}, {pipeline_mode = #tpu.pipeline_mode<synchronous>, transform_indices = @transform_11, window_bounds = array<i64: 1, 128>}, {pipeline_mode = #tpu.pipeline_mode<synchronous>, transform_indices = @transform_12, window_bounds = array<i64: 1, 128>}, {pipeline_mode = #tpu.pipeline_mode<synchronous>, transform_indices = @transform_13, window_bounds = array<i64: 1, 128>}, {transform_indices = @transform_14, window_bounds = array<i64: 128, 128>}, {transform_indices = @transform_15, window_bounds = array<i64: 1, 128>}, {transform_indices = @transform_16, window_bounds = array<i64: 8, 128>}]} {
    %c0_i32 = arith.constant 0 : i32
    %0 = arith.cmpi eq, %arg0, %c0_i32 : i32
    %1 = arith.extui %0 : i1 to i32
    %c0_i32_0 = arith.constant 0 : i32
    %2 = arith.cmpi ne, %1, %c0_i32_0 : i32
    scf.if %2 {
      %c0_8 = arith.constant 0 : index
      %c0_9 = arith.constant 0 : index
      %11 = vector.load %arg1[%c0_8, %c0_9] : memref<8x16xf32, #tpu.memory_space<vmem>>, vector<8x16xf32>
      %12 = arith.truncf %11 : vector<8x16xf32> to vector<8x16xbf16>
      %c0_10 = arith.constant 0 : index
      %c0_11 = arith.constant 0 : index
      %13 = vector.load %arg3[%c0_10, %c0_11] : memref<16x32xbf16, #tpu.memory_space<vmem>>, vector<16x32xbf16>
      %cst_12 = arith.constant dense<0.000000e+00> : vector<8x32xf32>
      %14 = tpu.matmul %12, %13, %cst_12 {dimension_numbers = #tpu.dot_dimension_numbers<[1], [0], [0], [1], [0, 0, 1, 1], [], []>} : vector<8x16xbf16>, vector<16x32xbf16>, vector<8x32xf32> -> vector<8x32xf32>
      %c0_13 = arith.constant 0 : index
      %c0_14 = arith.constant 0 : index
      %15 = vector.load %arg2[%c0_13, %c0_14] : memref<8x32xf32, #tpu.memory_space<vmem>>, vector<8x32xf32>
      %16 = arith.addf %14, %15 : vector<8x32xf32>
      %c0_15 = arith.constant 0 : index
      %c0_16 = arith.constant 0 : index
      %17 = vector.load %arg4[%c0_15, %c0_16] : memref<1x32xf32, #tpu.memory_space<vmem>>, vector<1x32xf32>
      %18 = vector.broadcast %17 : vector<1x32xf32> to vector<8x32xf32>
      %19 = arith.addf %16, %18 : vector<8x32xf32>
      %cst_17 = arith.constant 2.000000e-01 : f32
      %20 = vector.broadcast %cst_17 : f32 to vector<8x32xf32>
      %21 = arith.mulf %20, %19 : vector<8x32xf32>
      %22 = arith.maximumf %19, %21 : vector<8x32xf32>
      %cst_18 = arith.constant dense<0.000000e+00> : vector<32xf32>
      %23 = vector.multi_reduction <add>, %22, %cst_18 [0] : vector<8x32xf32> to vector<32xf32>
      %24 = vector.shape_cast %23 : vector<32xf32> to vector<1x32xf32>
      %cst_19 = arith.constant 1.250000e-01 : f32
      %25 = vector.broadcast %cst_19 : f32 to vector<1x32xf32>
      %26 = arith.mulf %24, %25 : vector<1x32xf32>
      %27 = arith.mulf %22, %22 : vector<8x32xf32>
      %cst_20 = arith.constant dense<0.000000e+00> : vector<32xf32>
      %28 = vector.multi_reduction <add>, %27, %cst_20 [0] : vector<8x32xf32> to vector<32xf32>
      %29 = vector.shape_cast %28 : vector<32xf32> to vector<1x32xf32>
      %cst_21 = arith.constant 1.250000e-01 : f32
      %30 = vector.broadcast %cst_21 : f32 to vector<1x32xf32>
      %31 = arith.mulf %29, %30 : vector<1x32xf32>
      %32 = arith.mulf %26, %26 : vector<1x32xf32>
      %33 = arith.subf %31, %32 : vector<1x32xf32>
      %cst_22 = arith.constant 0.000000e+00 : f32
      %34 = vector.broadcast %cst_22 : f32 to vector<1x32xf32>
      %35 = arith.maximumf %33, %34 : vector<1x32xf32>
      %c0_23 = arith.constant 0 : index
      %c0_24 = arith.constant 0 : index
      %36 = vector.load %arg5[%c0_23, %c0_24] : memref<1x32xf32, #tpu.memory_space<vmem>>, vector<1x32xf32>
      %cst_25 = arith.constant 9.99999974E-6 : f32
      %37 = vector.broadcast %cst_25 : f32 to vector<1x32xf32>
      %38 = arith.addf %35, %37 : vector<1x32xf32>
      %39 = math.rsqrt %38 : vector<1x32xf32>
      %40 = arith.mulf %36, %39 : vector<1x32xf32>
      %c0_26 = arith.constant 0 : index
      %c0_27 = arith.constant 0 : index
      %41 = vector.load %arg6[%c0_26, %c0_27] : memref<1x32xf32, #tpu.memory_space<vmem>>, vector<1x32xf32>
      %42 = arith.mulf %26, %40 : vector<1x32xf32>
      %43 = arith.subf %41, %42 : vector<1x32xf32>
      %44 = vector.broadcast %40 : vector<1x32xf32> to vector<8x32xf32>
      %45 = arith.mulf %22, %44 : vector<8x32xf32>
      %46 = vector.broadcast %43 : vector<1x32xf32> to vector<8x32xf32>
      %47 = arith.addf %45, %46 : vector<8x32xf32>
      %48 = arith.truncf %47 : vector<8x32xf32> to vector<8x32xbf16>
      %c0_28 = arith.constant 0 : index
      %c0_29 = arith.constant 0 : index
      %49 = vector.load %arg7[%c0_28, %c0_29] : memref<32x64xbf16, #tpu.memory_space<vmem>>, vector<32x64xbf16>
      %cst_30 = arith.constant dense<0.000000e+00> : vector<8x64xf32>
      %50 = tpu.matmul %48, %49, %cst_30 {dimension_numbers = #tpu.dot_dimension_numbers<[1], [0], [0], [1], [0, 0, 1, 1], [], []>} : vector<8x32xbf16>, vector<32x64xbf16>, vector<8x64xf32> -> vector<8x64xf32>
      %c0_31 = arith.constant 0 : index
      %c0_32 = arith.constant 0 : index
      %51 = vector.load %arg8[%c0_31, %c0_32] : memref<1x64xf32, #tpu.memory_space<vmem>>, vector<1x64xf32>
      %52 = vector.broadcast %51 : vector<1x64xf32> to vector<8x64xf32>
      %53 = arith.addf %50, %52 : vector<8x64xf32>
      %cst_33 = arith.constant 2.000000e-01 : f32
      %54 = vector.broadcast %cst_33 : f32 to vector<8x64xf32>
      %55 = arith.mulf %54, %53 : vector<8x64xf32>
      %56 = arith.maximumf %53, %55 : vector<8x64xf32>
      %cst_34 = arith.constant dense<0.000000e+00> : vector<64xf32>
      %57 = vector.multi_reduction <add>, %56, %cst_34 [0] : vector<8x64xf32> to vector<64xf32>
      %58 = vector.shape_cast %57 : vector<64xf32> to vector<1x64xf32>
      %cst_35 = arith.constant 1.250000e-01 : f32
      %59 = vector.broadcast %cst_35 : f32 to vector<1x64xf32>
      %60 = arith.mulf %58, %59 : vector<1x64xf32>
      %61 = arith.mulf %56, %56 : vector<8x64xf32>
      %cst_36 = arith.constant dense<0.000000e+00> : vector<64xf32>
      %62 = vector.multi_reduction <add>, %61, %cst_36 [0] : vector<8x64xf32> to vector<64xf32>
      %63 = vector.shape_cast %62 : vector<64xf32> to vector<1x64xf32>
      %cst_37 = arith.constant 1.250000e-01 : f32
      %64 = vector.broadcast %cst_37 : f32 to vector<1x64xf32>
      %65 = arith.mulf %63, %64 : vector<1x64xf32>
      %66 = arith.mulf %60, %60 : vector<1x64xf32>
      %67 = arith.subf %65, %66 : vector<1x64xf32>
      %cst_38 = arith.constant 0.000000e+00 : f32
      %68 = vector.broadcast %cst_38 : f32 to vector<1x64xf32>
      %69 = arith.maximumf %67, %68 : vector<1x64xf32>
      %c0_39 = arith.constant 0 : index
      %c0_40 = arith.constant 0 : index
      %70 = vector.load %arg9[%c0_39, %c0_40] : memref<1x64xf32, #tpu.memory_space<vmem>>, vector<1x64xf32>
      %cst_41 = arith.constant 9.99999974E-6 : f32
      %71 = vector.broadcast %cst_41 : f32 to vector<1x64xf32>
      %72 = arith.addf %69, %71 : vector<1x64xf32>
      %73 = math.rsqrt %72 : vector<1x64xf32>
      %74 = arith.mulf %70, %73 : vector<1x64xf32>
      %c0_42 = arith.constant 0 : index
      %c0_43 = arith.constant 0 : index
      %75 = vector.load %arg10[%c0_42, %c0_43] : memref<1x64xf32, #tpu.memory_space<vmem>>, vector<1x64xf32>
      %76 = arith.mulf %60, %74 : vector<1x64xf32>
      %77 = arith.subf %75, %76 : vector<1x64xf32>
      %78 = vector.broadcast %74 : vector<1x64xf32> to vector<8x64xf32>
      %79 = arith.mulf %56, %78 : vector<8x64xf32>
      %80 = vector.broadcast %77 : vector<1x64xf32> to vector<8x64xf32>
      %81 = arith.addf %79, %80 : vector<8x64xf32>
      %82 = arith.truncf %81 : vector<8x64xf32> to vector<8x64xbf16>
      %c0_44 = arith.constant 0 : index
      %c0_45 = arith.constant 0 : index
      %83 = vector.load %arg11[%c0_44, %c0_45] : memref<64x128xbf16, #tpu.memory_space<vmem>>, vector<64x128xbf16>
      %cst_46 = arith.constant dense<0.000000e+00> : vector<8x128xf32>
      %84 = tpu.matmul %82, %83, %cst_46 {dimension_numbers = #tpu.dot_dimension_numbers<[1], [0], [0], [1], [0, 0, 1, 1], [], []>} : vector<8x64xbf16>, vector<64x128xbf16>, vector<8x128xf32> -> vector<8x128xf32>
      %c0_47 = arith.constant 0 : index
      %c0_48 = arith.constant 0 : index
      %85 = vector.load %arg12[%c0_47, %c0_48] : memref<1x128xf32, #tpu.memory_space<vmem>>, vector<1x128xf32>
      %86 = vector.broadcast %85 : vector<1x128xf32> to vector<8x128xf32>
      %87 = arith.addf %84, %86 : vector<8x128xf32>
      %cst_49 = arith.constant 2.000000e-01 : f32
      %88 = vector.broadcast %cst_49 : f32 to vector<8x128xf32>
      %89 = arith.mulf %88, %87 : vector<8x128xf32>
      %90 = arith.maximumf %87, %89 : vector<8x128xf32>
      %cst_50 = arith.constant dense<0.000000e+00> : vector<128xf32>
      %91 = vector.multi_reduction <add>, %90, %cst_50 [0] : vector<8x128xf32> to vector<128xf32>
      %92 = vector.shape_cast %91 : vector<128xf32> to vector<1x128xf32>
      %cst_51 = arith.constant 1.250000e-01 : f32
      %93 = vector.broadcast %cst_51 : f32 to vector<1x128xf32>
      %94 = arith.mulf %92, %93 : vector<1x128xf32>
      %95 = arith.mulf %90, %90 : vector<8x128xf32>
      %cst_52 = arith.constant dense<0.000000e+00> : vector<128xf32>
      %96 = vector.multi_reduction <add>, %95, %cst_52 [0] : vector<8x128xf32> to vector<128xf32>
      %97 = vector.shape_cast %96 : vector<128xf32> to vector<1x128xf32>
      %cst_53 = arith.constant 1.250000e-01 : f32
      %98 = vector.broadcast %cst_53 : f32 to vector<1x128xf32>
      %99 = arith.mulf %97, %98 : vector<1x128xf32>
      %100 = arith.mulf %94, %94 : vector<1x128xf32>
      %101 = arith.subf %99, %100 : vector<1x128xf32>
      %cst_54 = arith.constant 0.000000e+00 : f32
      %102 = vector.broadcast %cst_54 : f32 to vector<1x128xf32>
      %103 = arith.maximumf %101, %102 : vector<1x128xf32>
      %c0_55 = arith.constant 0 : index
      %c0_56 = arith.constant 0 : index
      %104 = vector.load %arg13[%c0_55, %c0_56] : memref<1x128xf32, #tpu.memory_space<vmem>>, vector<1x128xf32>
      %cst_57 = arith.constant 9.99999974E-6 : f32
      %105 = vector.broadcast %cst_57 : f32 to vector<1x128xf32>
      %106 = arith.addf %103, %105 : vector<1x128xf32>
      %107 = math.rsqrt %106 : vector<1x128xf32>
      %108 = arith.mulf %104, %107 : vector<1x128xf32>
      %c0_58 = arith.constant 0 : index
      %c0_59 = arith.constant 0 : index
      %109 = vector.load %arg14[%c0_58, %c0_59] : memref<1x128xf32, #tpu.memory_space<vmem>>, vector<1x128xf32>
      %110 = arith.mulf %94, %108 : vector<1x128xf32>
      %111 = arith.subf %109, %110 : vector<1x128xf32>
      %112 = vector.broadcast %108 : vector<1x128xf32> to vector<8x128xf32>
      %113 = arith.mulf %90, %112 : vector<8x128xf32>
      %114 = vector.broadcast %111 : vector<1x128xf32> to vector<8x128xf32>
      %115 = arith.addf %113, %114 : vector<8x128xf32>
      %116 = arith.truncf %115 : vector<8x128xf32> to vector<8x128xbf16>
      %c0_60 = arith.constant 0 : index
      %c0_61 = arith.constant 0 : index
      %117 = vector.load %arg18[%c0_60, %c0_61] : memref<8x128xbf16, #tpu.memory_space<vmem>>, vector<8x128xbf16>
      tpu.vector_store %arg18[%c0_60, %c0_61], %116 {strides = array<i32>} : memref<8x128xbf16, #tpu.memory_space<vmem>>, vector<8x128xbf16>,
    } else {
    }
    %c0 = arith.constant 0 : index
    %c0_1 = arith.constant 0 : index
    %3 = vector.load %arg18[%c0, %c0_1] : memref<8x128xbf16, #tpu.memory_space<vmem>>, vector<8x128xbf16>
    %c0_2 = arith.constant 0 : index
    %c0_3 = arith.constant 0 : index
    %4 = vector.load %arg15[%c0_2, %c0_3] : memref<128x128xbf16, #tpu.memory_space<vmem>>, vector<128x128xbf16>
    %cst = arith.constant dense<0.000000e+00> : vector<8x128xf32>
    %5 = tpu.matmul %3, %4, %cst {dimension_numbers = #tpu.dot_dimension_numbers<[1], [0], [0], [1], [0, 0, 1, 1], [], []>} : vector<8x128xbf16>, vector<128x128xbf16>, vector<8x128xf32> -> vector<8x128xf32>
    %c0_4 = arith.constant 0 : index
    %c0_5 = arith.constant 0 : index
    %6 = vector.load %arg16[%c0_4, %c0_5] : memref<1x128xf32, #tpu.memory_space<vmem>>, vector<1x128xf32>
    %7 = vector.broadcast %6 : vector<1x128xf32> to vector<8x128xf32>
    %8 = arith.addf %5, %7 : vector<8x128xf32>
    %9 = math.tanh %8 : vector<8x128xf32>
    %c0_6 = arith.constant 0 : index
    %c0_7 = arith.constant 0 : index
    %10 = vector.load %arg17[%c0_6, %c0_7] : memref<8x128xf32, #tpu.memory_space<vmem>>, vector<8x128xf32>
    tpu.vector_store %arg17[%c0_6, %c0_7], %9 {strides = array<i32>} : memref<8x128xf32, #tpu.memory_space<vmem>>, vector<8x128xf32>,
    return
  }
  func.func @transform_0(%arg0: i32) -> (i32, i32) {
    %c0_i32 = arith.constant 0 : i32
    %c0_i32_0 = arith.constant 0 : i32
    %c0_i32_1 = arith.constant 0 : i32
    return %c0_i32, %c0_i32_0 : i32, i32
  }
  func.func @transform_1(%arg0: i32) -> (i32, i32) {
    %c0_i32 = arith.constant 0 : i32
    %c0_i32_0 = arith.constant 0 : i32
    %c0_i32_1 = arith.constant 0 : i32
    return %c0_i32, %c0_i32_0 : i32, i32
  }
  func.func @transform_2(%arg0: i32) -> (i32, i32) {
    %c0_i32 = arith.constant 0 : i32
    %c0_i32_0 = arith.constant 0 : i32
    %c0_i32_1 = arith.constant 0 : i32
    return %c0_i32, %c0_i32_0 : i32, i32
  }
  func.func @transform_3(%arg0: i32) -> (i32, i32) {
    %c0_i32 = arith.constant 0 : i32
    %c0_i32_0 = arith.constant 0 : i32
    %c0_i32_1 = arith.constant 0 : i32
    return %c0_i32, %c0_i32_0 : i32, i32
  }
  func.func @transform_4(%arg0: i32) -> (i32, i32) {
    %c0_i32 = arith.constant 0 : i32
    %c0_i32_0 = arith.constant 0 : i32
    %c0_i32_1 = arith.constant 0 : i32
    return %c0_i32, %c0_i32_0 : i32, i32
  }
  func.func @transform_5(%arg0: i32) -> (i32, i32) {
    %c0_i32 = arith.constant 0 : i32
    %c0_i32_0 = arith.constant 0 : i32
    %c0_i32_1 = arith.constant 0 : i32
    return %c0_i32, %c0_i32_0 : i32, i32
  }
  func.func @transform_6(%arg0: i32) -> (i32, i32) {
    %c0_i32 = arith.constant 0 : i32
    %c0_i32_0 = arith.constant 0 : i32
    %c0_i32_1 = arith.constant 0 : i32
    return %c0_i32, %c0_i32_0 : i32, i32
  }
  func.func @transform_7(%arg0: i32) -> (i32, i32) {
    %c0_i32 = arith.constant 0 : i32
    %c0_i32_0 = arith.constant 0 : i32
    %c0_i32_1 = arith.constant 0 : i32
    return %c0_i32, %c0_i32_0 : i32, i32
  }
  func.func @transform_8(%arg0: i32) -> (i32, i32) {
    %c0_i32 = arith.constant 0 : i32
    %c0_i32_0 = arith.constant 0 : i32
    %c0_i32_1 = arith.constant 0 : i32
    return %c0_i32, %c0_i32_0 : i32, i32
  }
  func.func @transform_9(%arg0: i32) -> (i32, i32) {
    %c0_i32 = arith.constant 0 : i32
    %c0_i32_0 = arith.constant 0 : i32
    %c0_i32_1 = arith.constant 0 : i32
    return %c0_i32, %c0_i32_0 : i32, i32
  }
  func.func @transform_10(%arg0: i32) -> (i32, i32) {
    %c0_i32 = arith.constant 0 : i32
    %c0_i32_0 = arith.constant 0 : i32
    %c0_i32_1 = arith.constant 0 : i32
    return %c0_i32, %c0_i32_0 : i32, i32
  }
  func.func @transform_11(%arg0: i32) -> (i32, i32) {
    %c0_i32 = arith.constant 0 : i32
    %c0_i32_0 = arith.constant 0 : i32
    %c0_i32_1 = arith.constant 0 : i32
    return %c0_i32, %c0_i32_0 : i32, i32
  }
  func.func @transform_12(%arg0: i32) -> (i32, i32) {
    %c0_i32 = arith.constant 0 : i32
    %c0_i32_0 = arith.constant 0 : i32
    %c0_i32_1 = arith.constant 0 : i32
    return %c0_i32, %c0_i32_0 : i32, i32
  }
  func.func @transform_13(%arg0: i32) -> (i32, i32) {
    %c0_i32 = arith.constant 0 : i32
    %c0_i32_0 = arith.constant 0 : i32
    %c0_i32_1 = arith.constant 0 : i32
    return %c0_i32, %c0_i32_0 : i32, i32
  }
  func.func @transform_14(%arg0: i32) -> (i32, i32) {
    %c0_i32 = arith.constant 0 : i32
    %c0_i32_0 = arith.constant 0 : i32
    return %c0_i32, %arg0 : i32, i32
  }
  func.func @transform_15(%arg0: i32) -> (i32, i32) {
    %c0_i32 = arith.constant 0 : i32
    %c0_i32_0 = arith.constant 0 : i32
    return %c0_i32, %arg0 : i32, i32
  }
  func.func @transform_16(%arg0: i32) -> (i32, i32) {
    %c0_i32 = arith.constant 0 : i32
    %c0_i32_0 = arith.constant 0 : i32
    return %c0_i32, %arg0 : i32, i32
  }
}

</mosaic_0001>

<llo_original>
// kernel: generator_forward.1
$region0: #{generator_forward.1}
  #allocation0 [shape = 'u32[]', space=smem, size = 0x4, offset = 0x4, fixed_abs, tag = 'smem constant byte address 0x4 - core index']
  #allocation1 [shape = 'u32[144,128]{1,0:T(1,128)}', space=vmem, size = 0x12000, scoped, tag = 'internal scratch']
  #allocation2 [shape = 'bf16[8,128]{1,0:T(8,128)(2,1)}', space=vmem, size = 0x800, scoped, tag = 'scratch operand']
  %s0 = inlined_call_operand.hbm [shape: f32[8,16], index: 0, kind: input, shape index: {}]
  %s1 = inlined_call_operand.hbm [shape: f32[8,32], index: 1, kind: input, shape index: {}]
  %s2 = inlined_call_operand.hbm [shape: bf16[16,32], index: 2, kind: input, shape index: {}]
  %s3 = inlined_call_operand.hbm [shape: f32[1,32], index: 3, kind: input, shape index: {}]
  %s4 = inlined_call_operand.hbm [shape: f32[1,32], index: 4, kind: input, shape index: {}]
  %s5 = inlined_call_operand.hbm [shape: f32[1,32], index: 5, kind: input, shape index: {}]
  %s6 = inlined_call_operand.hbm [shape: bf16[32,64], index: 6, kind: input, shape index: {}]
  %s7 = inlined_call_operand.hbm [shape: f32[1,64], index: 7, kind: input, shape index: {}]
  %s8 = inlined_call_operand.hbm [shape: f32[1,64], index: 8, kind: input, shape index: {}]
  %s9 = inlined_call_operand.hbm [shape: f32[1,64], index: 9, kind: input, shape index: {}]
  %s10 = inlined_call_operand.hbm [shape: bf16[64,128], index: 10, kind: input, shape index: {}]
  %s11 = inlined_call_operand.hbm [shape: f32[1,128], index: 11, kind: input, shape index: {}]
  %s12 = inlined_call_operand.hbm [shape: f32[1,128], index: 12, kind: input, shape index: {}]
  %s13 = inlined_call_operand.hbm [shape: f32[1,128], index: 13, kind: input, shape index: {}]
  %s14 = inlined_call_operand.hbm [shape: bf16[128,128], index: 14, kind: input, shape index: {}]
  %s15 = inlined_call_operand.hbm [shape: f32[1,128], index: 15, kind: input, shape index: {}]
  %s16 = inlined_call_operand.hbm [shape: f32[8,128], index: 16, kind: output, shape index: {}]
  %s17 = sld [smem:[#allocation0]]
  $region142: #{generator_forward.1} parent=0
    _
  %s19 = ssub.s32 1, %s17
  %s20 = scalar_select 0, %s19, %s17
  $region1: #{generator_forward.1} parent=0
    #allocation3 [shape = 'u8[4096]{0}', space=vmem, size = 0x1000, scoped, tag = 'input window, operand 0, single buffered']
    #allocation4 [shape = 's32[1]{0}', space=sflag, size = 0x4, scoped, tag = 'scoped memory for generator_forward.1']
    #allocation5 [shape = 's32[1]{0}', space=sflag, size = 0x4, scoped, tag = 'scoped memory for generator_forward.1']
    #allocation6 [shape = 'u8[4096]{0}', space=vmem, size = 0x1000, scoped, tag = 'input window, operand 1, single buffered']
    #allocation7 [shape = 's32[1]{0}', space=sflag, size = 0x4, scoped, tag = 'scoped memory for generator_forward.1']
    #allocation8 [shape = 'u8[4096]{0}', space=vmem, size = 0x1000, scoped, tag = 'input window, operand 2, single buffered']
    #allocation9 [shape = 'u8[512]{0}', space=vmem, size = 0x400, scoped, tag = 'input window, operand 3, single buffered']
    #allocation10 [shape = 's32[1]{0}', space=sflag, size = 0x4, scoped, tag = 'scoped memory for generator_forward.1']
    #allocation11 [shape = 'u8[512]{0}', space=vmem, size = 0x400, scoped, tag = 'input window, operand 4, single buffered']
    #allocation12 [shape = 'u8[512]{0}', space=vmem, size = 0x400, scoped, tag = 'input window, operand 5, single buffered']
    #allocation13 [shape = 's32[1]{0}', space=sflag, size = 0x4, scoped, tag = 'scoped memory for generator_forward.1']
    #allocation14 [shape = 'u8[8192]{0}', space=vmem, size = 0x2000, scoped, tag = 'input window, operand 6, single buffered']
    #allocation15 [shape = 'u8[512]{0}', space=vmem, size = 0x400, scoped, tag = 'input window, operand 7, single buffered']
    #allocation16 [shape = 's32[1]{0}', space=sflag, size = 0x4, scoped, tag = 'scoped memory for generator_forward.1']
    #allocation17 [shape = 'u8[512]{0}', space=vmem, size = 0x400, scoped, tag = 'input window, operand 8, single buffered']
    #allocation18 [shape = 'u8[512]{0}', space=vmem, size = 0x400, scoped, tag = 'input window, operand 9, single buffered']
    #allocation19 [shape = 's32[1]{0}', space=sflag, size = 0x4, scoped, tag = 'scoped memory for generator_forward.1']
    #allocation20 [shape = 'u8[16384]{0}', space=vmem, size = 0x4000, scoped, tag = 'input window, operand 10, single buffered']
    #allocation21 [shape = 'u8[512]{0}', space=vmem, size = 0x400, scoped, tag = 'input window, operand 11, single buffered']
    #allocation22 [shape = 's32[1]{0}', space=sflag, size = 0x4, scoped, tag = 'scoped memory for generator_forward.1']
    #allocation23 [shape = 'u8[512]{0}', space=vmem, size = 0x400, scoped, tag = 'input window, operand 12, single buffered']
    #allocation24 [shape = 'u8[512]{0}', space=vmem, size = 0x400, scoped, tag = 'input window, operand 13, single buffered']
    #allocation25 [shape = 's32[1]{0}', space=sflag, size = 0x4, scoped, tag = 'scoped memory for generator_forward.1']
    #allocation26 [shape = 'u8[32768]{0}', space=vmem, size = 0x8000, scoped, tag = 'input window, operand 14, single buffered']
    #allocation27 [shape = 'u8[512]{0}', space=vmem, size = 0x400, scoped, tag = 'input window, operand 15, single buffered']
    #allocation28 [shape = 's32[1]{0}', space=sflag, size = 0x4, scoped, tag = 'scoped memory for generator_forward.1']
    #allocation29 [shape = 'u8[4096]{0}', space=vmem, size = 0x1000, scoped, tag = 'output window, operand 0, single buffered']
    %21 = vsyncpa [#allocation4], 0
    %22 = vsyncpa [#allocation7], 0
    %23 = vsyncpa [#allocation10], 0
    %24 = vsyncpa [#allocation13], 0
    %25 = vsyncpa [#allocation16], 0
    %26 = vsyncpa [#allocation19], 0
    %27 = vsyncpa [#allocation22], 0
    %28 = vsyncpa [#allocation25], 0
    %29 = vsyncpa [#allocation28], 0
    %30 = vsyncpa [#allocation5], 0
    // Predicated region
    $region2: #{generator_forward.1} parent=1 // pred_check
      _
    $region3: #{generator_forward.1} parent=1 // pred_check_branch
      %32 = sbr.rel (0) target = $region5
    $region4: #{generator_forward.1} parent=1 // pred_region
      %s34 = ssub.s32 128, 128
      %35 = vsyncadd [#allocation4], %s34
      %s37 = sshll.u32 [#allocation3], 4
      %s38 = int_to_ptr.vmem [resolvable:$true] %s37
      %40 = dma.hbm_to_vmem [thread:$0]  %s0, 128, %s38, [#allocation4]
    $region5: #{generator_forward.1} parent=1 // pred_fallthru
      _
    // Predicated region
    $region6: #{generator_forward.1} parent=1 // pred_check
      _
    $region7: #{generator_forward.1} parent=1 // pred_check_branch
      %42 = sbr.rel (0) target = $region9
    $region8: #{generator_forward.1} parent=1 // pred_region
      %s44 = ssub.s32 128, 128
      %45 = vsyncadd [#allocation7], %s44
      %s47 = sshll.u32 [#allocation6], 4
      %s48 = int_to_ptr.vmem [resolvable:$true] %s47
      %50 = dma.hbm_to_vmem [thread:$0]  %s1, 128, %s48, [#allocation7]
    $region9: #{generator_forward.1} parent=1 // pred_fallthru
      _
    // Predicated region
    $region10: #{generator_forward.1} parent=1 // pred_check
      _
    $region11: #{generator_forward.1} parent=1 // pred_check_branch
      %52 = sbr.rel (0) target = $region13
    $region12: #{generator_forward.1} parent=1 // pred_region
      %s54 = ssub.s32 128, 128
      %55 = vsyncadd [#allocation7], %s54
      %s56 = sshll.u32 [#allocation8], 4
      %s57 = int_to_ptr.vmem [resolvable:$true] %s56
      %62 = dma.hbm_to_vmem [thread:$0]  %s2, 128, %s57, [#allocation7], 64, 64, 4
    $region13: #{generator_forward.1} parent=1 // pred_fallthru
      _
    // Predicated region
    $region14: #{generator_forward.1} parent=1 // pred_check
      _
    $region15: #{generator_forward.1} parent=1 // pred_check_branch
      %64 = sbr.rel (0) target = $region17
    $region16: #{generator_forward.1} parent=1 // pred_region
      %s66 = ssub.s32 16, 16
      %67 = vsyncadd [#allocation10], %s66
      %s69 = sshll.u32 [#allocation9], 4
      %s70 = int_to_ptr.vmem [resolvable:$true] %s69
      %72 = dma.hbm_to_vmem [thread:$0]  %s3, 16, %s70, [#allocation10]
    $region17: #{generator_forward.1} parent=1 // pred_fallthru
      _
    // Predicated region
    $region18: #{generator_forward.1} parent=1 // pred_check
      _
    $region19: #{generator_forward.1} parent=1 // pred_check_branch
      %74 = sbr.rel (0) target = $region21
    $region20: #{generator_forward.1} parent=1 // pred_region
      %s76 = ssub.s32 16, 16
      %77 = vsyncadd [#allocation10], %s76
      %s79 = sshll.u32 [#allocation11], 4
      %s80 = int_to_ptr.vmem [resolvable:$true] %s79
      %82 = dma.hbm_to_vmem [thread:$0]  %s4, 16, %s80, [#allocation10]
    $region21: #{generator_forward.1} parent=1 // pred_fallthru
      _
    // Predicated region
    $region22: #{generator_forward.1} parent=1 // pred_check
      _
    $region23: #{generator_forward.1} parent=1 // pred_check_branch
      %84 = sbr.rel (0) target = $region25
    $region24: #{generator_forward.1} parent=1 // pred_region
      %s86 = ssub.s32 16, 16
      %87 = vsyncadd [#allocation13], %s86
      %s89 = sshll.u32 [#allocation12], 4
      %s90 = int_to_ptr.vmem [resolvable:$true] %s89
      %92 = dma.hbm_to_vmem [thread:$0]  %s5, 16, %s90, [#allocation13]
    $region25: #{generator_forward.1} parent=1 // pred_fallthru
      _
    // Predicated region
    $region26: #{generator_forward.1} parent=1 // pred_check
      _
    $region27: #{generator_forward.1} parent=1 // pred_check_branch
      %94 = sbr.rel (0) target = $region29
    $region28: #{generator_forward.1} parent=1 // pred_region
      %s96 = ssub.s32 256, 256
      %97 = vsyncadd [#allocation13], %s96
      %s98 = sshll.u32 [#allocation14], 4
      %s99 = int_to_ptr.vmem [resolvable:$true] %s98
      %104 = dma.hbm_to_vmem [thread:$0]  %s6, 256, %s99, [#allocation13], 64, 64, 4
    $region29: #{generator_forward.1} parent=1 // pred_fallthru
      _
    // Predicated region
    $region30: #{generator_forward.1} parent=1 // pred_check
      _
    $region31: #{generator_forward.1} parent=1 // pred_check_branch
      %106 = sbr.rel (0) target = $region33
    $region32: #{generator_forward.1} parent=1 // pred_region
      %s108 = ssub.s32 16, 16
      %109 = vsyncadd [#allocation16], %s108
      %s111 = sshll.u32 [#allocation15], 4
      %s112 = int_to_ptr.vmem [resolvable:$true] %s111
      %114 = dma.hbm_to_vmem [thread:$0]  %s7, 16, %s112, [#allocation16]
    $region33: #{generator_forward.1} parent=1 // pred_fallthru
      _
    // Predicated region
    $region34: #{generator_forward.1} parent=1 // pred_check
      _
    $region35: #{generator_forward.1} parent=1 // pred_check_branch
      %116 = sbr.rel (0) target = $region37
    $region36: #{generator_forward.1} parent=1 // pred_region
      %s118 = ssub.s32 16, 16
      %119 = vsyncadd [#allocation16], %s118
      %s121 = sshll.u32 [#allocation17], 4
      %s122 = int_to_ptr.vmem [resolvable:$true] %s121
      %124 = dma.hbm_to_vmem [thread:$0]  %s8, 16, %s122, [#allocation16]
    $region37: #{generator_forward.1} parent=1 // pred_fallthru
      _
    // Predicated region
    $region38: #{generator_forward.1} parent=1 // pred_check
      _
    $region39: #{generator_forward.1} parent=1 // pred_check_branch
      %126 = sbr.rel (0) target = $region41
    $region40: #{generator_forward.1} parent=1 // pred_region
      %s128 = ssub.s32 16, 16
      %129 = vsyncadd [#allocation19], %s128
      %s131 = sshll.u32 [#allocation18], 4
      %s132 = int_to_ptr.vmem [resolvable:$true] %s131
      %134 = dma.hbm_to_vmem [thread:$0]  %s9, 16, %s132, [#allocation19]
    $region41: #{generator_forward.1} parent=1 // pred_fallthru
      _
    // Predicated region
    $region42: #{generator_forward.1} parent=1 // pred_check
      _
    $region43: #{generator_forward.1} parent=1 // pred_check_branch
      %136 = sbr.rel (0) target = $region45
    $region44: #{generator_forward.1} parent=1 // pred_region
      %s138 = ssub.s32 512, 512
      %139 = vsyncadd [#allocation19], %s138
      %s140 = sshll.u32 [#allocation20], 4
      %s141 = int_to_ptr.vmem [resolvable:$true] %s140
      %146 = dma.hbm_to_vmem [thread:$0]  %s10, 512, %s141, [#allocation19], 64, 64, 4
    $region45: #{generator_forward.1} parent=1 // pred_fallthru
      _
    // Predicated region
    $region46: #{generator_forward.1} parent=1 // pred_check
      _
    $region47: #{generator_forward.1} parent=1 // pred_check_branch
      %148 = sbr.rel (0) target = $region49
    $region48: #{generator_forward.1} parent=1 // pred_region
      %s150 = ssub.s32 16, 16
      %151 = vsyncadd [#allocation22], %s150
      %s153 = sshll.u32 [#allocation21], 4
      %s154 = int_to_ptr.vmem [resolvable:$true] %s153
      %156 = dma.hbm_to_vmem [thread:$0]  %s11, 16, %s154, [#allocation22]
    $region49: #{generator_forward.1} parent=1 // pred_fallthru
      _
    // Predicated region
    $region50: #{generator_forward.1} parent=1 // pred_check
      _
    $region51: #{generator_forward.1} parent=1 // pred_check_branch
      %158 = sbr.rel (0) target = $region53
    $region52: #{generator_forward.1} parent=1 // pred_region
      %s160 = ssub.s32 16, 16
      %161 = vsyncadd [#allocation22], %s160
      %s163 = sshll.u32 [#allocation23], 4
      %s164 = int_to_ptr.vmem [resolvable:$true] %s163
      %166 = dma.hbm_to_vmem [thread:$0]  %s12, 16, %s164, [#allocation22]
    $region53: #{generator_forward.1} parent=1 // pred_fallthru
      _
    // Predicated region
    $region54: #{generator_forward.1} parent=1 // pred_check
      _
    $region55: #{generator_forward.1} parent=1 // pred_check_branch
      %168 = sbr.rel (0) target = $region57
    $region56: #{generator_forward.1} parent=1 // pred_region
      %s170 = ssub.s32 16, 16
      %171 = vsyncadd [#allocation25], %s170
      %s173 = sshll.u32 [#allocation24], 4
      %s174 = int_to_ptr.vmem [resolvable:$true] %s173
      %176 = dma.hbm_to_vmem [thread:$0]  %s13, 16, %s174, [#allocation25]
    $region57: #{generator_forward.1} parent=1 // pred_fallthru
      _
    // Predicated region
    $region58: #{generator_forward.1} parent=1 // pred_check
      _
    $region59: #{generator_forward.1} parent=1 // pred_check_branch
      %178 = sbr.rel (0) target = $region61
    $region60: #{generator_forward.1} parent=1 // pred_region
      %s180 = ssub.s32 1024, 1024
      %181 = vsyncadd [#allocation25], %s180
      %s182 = sshll.u32 [#allocation26], 4
      %s183 = int_to_ptr.vmem [resolvable:$true] %s182
      %188 = dma.hbm_to_vmem [thread:$0]  %s14, 1024, %s183, [#allocation25], 64, 64, 4
    $region61: #{generator_forward.1} parent=1 // pred_fallthru
      _
    // Predicated region
    $region62: #{generator_forward.1} parent=1 // pred_check
      _
    $region63: #{generator_forward.1} parent=1 // pred_check_branch
      %190 = sbr.rel (0) target = $region65
    $region64: #{generator_forward.1} parent=1 // pred_region
      %s192 = ssub.s32 16, 16
      %193 = vsyncadd [#allocation28], %s192
      %s195 = sshll.u32 [#allocation27], 4
      %s196 = int_to_ptr.vmem [resolvable:$true] %s195
      %198 = dma.hbm_to_vmem [thread:$0]  %s15, 16, %s196, [#allocation28]
    $region65: #{generator_forward.1} parent=1 // pred_fallthru
      _
    // Predicated region
    $region66: #{generator_forward.1} parent=1 // pred_check
      _
    $region67: #{generator_forward.1} parent=1 // pred_check_branch
      %200 = sbr.rel (0) target = $region69
    $region68: #{generator_forward.1} parent=1 // pred_region
      %201 = dma.done [#allocation4], 128
    $region69: #{generator_forward.1} parent=1 // pred_fallthru
      _
    // Predicated region
    $region70: #{generator_forward.1} parent=1 // pred_check
      _
    $region71: #{generator_forward.1} parent=1 // pred_check_branch
      %203 = sbr.rel (0) target = $region73
    $region72: #{generator_forward.1} parent=1 // pred_region
      %204 = dma.done [#allocation7], 128
    $region73: #{generator_forward.1} parent=1 // pred_fallthru
      _
    // Predicated region
    $region74: #{generator_forward.1} parent=1 // pred_check
      _
    $region75: #{generator_forward.1} parent=1 // pred_check_branch
      %206 = sbr.rel (0) target = $region77
    $region76: #{generator_forward.1} parent=1 // pred_region
      %207 = dma.done [#allocation7], 128
    $region77: #{generator_forward.1} parent=1 // pred_fallthru
      _
    // Predicated region
    $region78: #{generator_forward.1} parent=1 // pred_check
      _
    $region79: #{generator_forward.1} parent=1 // pred_check_branch
      %209 = sbr.rel (0) target = $region81
    $region80: #{generator_forward.1} parent=1 // pred_region
      %210 = dma.done [#allocation10], 16
    $region81: #{generator_forward.1} parent=1 // pred_fallthru
      _
    // Predicated region
    $region82: #{generator_forward.1} parent=1 // pred_check
      _
    $region83: #{generator_forward.1} parent=1 // pred_check_branch
      %212 = sbr.rel (0) target = $region85
    $region84: #{generator_forward.1} parent=1 // pred_region
      %213 = dma.done [#allocation10], 16
    $region85: #{generator_forward.1} parent=1 // pred_fallthru
      _
    // Predicated region
    $region86: #{generator_forward.1} parent=1 // pred_check
      _
    $region87: #{generator_forward.1} parent=1 // pred_check_branch
      %215 = sbr.rel (0) target = $region89
    $region88: #{generator_forward.1} parent=1 // pred_region
      %216 = dma.done [#allocation13], 16
    $region89: #{generator_forward.1} parent=1 // pred_fallthru
      _
    // Predicated region
    $region90: #{generator_forward.1} parent=1 // pred_check
      _
    $region91: #{generator_forward.1} parent=1 // pred_check_branch
      %218 = sbr.rel (0) target = $region93
    $region92: #{generator_forward.1} parent=1 // pred_region
      %219 = dma.done [#allocation13], 256
    $region93: #{generator_forward.1} parent=1 // pred_fallthru
      _
    // Predicated region
    $region94: #{generator_forward.1} parent=1 // pred_check
      _
    $region95: #{generator_forward.1} parent=1 // pred_check_branch
      %221 = sbr.rel (0) target = $region97
    $region96: #{generator_forward.1} parent=1 // pred_region
      %222 = dma.done [#allocation16], 16
    $region97: #{generator_forward.1} parent=1 // pred_fallthru
      _
    // Predicated region
    $region98: #{generator_forward.1} parent=1 // pred_check
      _
    $region99: #{generator_forward.1} parent=1 // pred_check_branch
      %224 = sbr.rel (0) target = $region101
    $region100: #{generator_forward.1} parent=1 // pred_region
      %225 = dma.done [#allocation16], 16
    $region101: #{generator_forward.1} parent=1 // pred_fallthru
      _
    // Predicated region
    $region102: #{generator_forward.1} parent=1 // pred_check
      _
    $region103: #{generator_forward.1} parent=1 // pred_check_branch
      %227 = sbr.rel (0) target = $region105
    $region104: #{generator_forward.1} parent=1 // pred_region
      %228 = dma.done [#allocation19], 16
    $region105: #{generator_forward.1} parent=1 // pred_fallthru
      _
    // Predicated region
    $region106: #{generator_forward.1} parent=1 // pred_check
      _
    $region107: #{generator_forward.1} parent=1 // pred_check_branch
      %230 = sbr.rel (0) target = $region109
    $region108: #{generator_forward.1} parent=1 // pred_region
      %231 = dma.done [#allocation19], 512
    $region109: #{generator_forward.1} parent=1 // pred_fallthru
      _
    // Predicated region
    $region110: #{generator_forward.1} parent=1 // pred_check
      _
    $region111: #{generator_forward.1} parent=1 // pred_check_branch
      %233 = sbr.rel (0) target = $region113
    $region112: #{generator_forward.1} parent=1 // pred_region
      %234 = dma.done [#allocation22], 16
    $region113: #{generator_forward.1} parent=1 // pred_fallthru
      _
    // Predicated region
    $region114: #{generator_forward.1} parent=1 // pred_check
      _
    $region115: #{generator_forward.1} parent=1 // pred_check_branch
      %236 = sbr.rel (0) target = $region117
    $region116: #{generator_forward.1} parent=1 // pred_region
      %237 = dma.done [#allocation22], 16
    $region117: #{generator_forward.1} parent=1 // pred_fallthru
      _
    // Predicated region
    $region118: #{generator_forward.1} parent=1 // pred_check
      _
    $region119: #{generator_forward.1} parent=1 // pred_check_branch
      %239 = sbr.rel (0) target = $region121
    $region120: #{generator_forward.1} parent=1 // pred_region
      %240 = dma.done [#allocation25], 16
    $region121: #{generator_forward.1} parent=1 // pred_fallthru
      _
    // Predicated region
    $region122: #{generator_forward.1} parent=1 // pred_check
      _
    $region123: #{generator_forward.1} parent=1 // pred_check_branch
      %242 = sbr.rel (0) target = $region125
    $region124: #{generator_forward.1} parent=1 // pred_region
      %243 = dma.done [#allocation25], 1024
    $region125: #{generator_forward.1} parent=1 // pred_fallthru
      _
    // Predicated region
    $region126: #{generator_forward.1} parent=1 // pred_check
      _
    $region127: #{generator_forward.1} parent=1 // pred_check_branch
      %245 = sbr.rel (0) target = $region129
    $region128: #{generator_forward.1} parent=1 // pred_region
      %246 = dma.done [#allocation28], 16
    $region129: #{generator_forward.1} parent=1 // pred_fallthru
      _
    %p248 = scmp.eq.s32.totalorder 0, 0
    // Predicated region
    $region130: #{generator_forward.1} parent=1 // pred_check
      %p249 = pneg %p248
    $region131: #{generator_forward.1} parent=1 // pred_check_branch
      %251 = sbr.rel (%p249) target = $region133
    $region132: #{generator_forward.1} parent=1 // pred_region
      %v252 = vld [vmem:[#allocation3] sm:$0xff]
      %v253 = vpack.c.bf16 %v252, %v252
      %v254 = vld [vmem:[#allocation8] sm:$0xf]
      %v255 = vld [vmem:[#allocation8 + $0x4] sm:$0xf]
      %v256 = vld [vmem:[#allocation6] sm:$0xff]
      %v259 = vunpack.c.l.b16 %v254
      %v260 = vunpack.c.l.b16 %v255
      %v261 = vpack.c.b16 %v260, %v259
      %vm263 = vcmask 130048
      %v265 = vsel %vm263, %v253, 0
      %267 = vmatprep.subr.bf16.mxu0 0
      %268 = vmatpush1.bf16.msra.mxu0 %v261
      %269 = vmatprep.subr.bf16.mxu0 0
      %270 = vmatpush1.bf16.msra.mxu0 0
      %271 = vmatprep.subr.bf16.mxu0 0
      %272 = vmatpush1.bf16.msra.mxu0 0
      %273 = vmatprep.subr.bf16.mxu0 0
      %274 = vmatpush1.bf16.msra.mxu0 0
      %275 = vmatprep.subr.bf16.mxu0 0
      %276 = vmatpush1.bf16.msra.mxu0 0
      %277 = vmatprep.subr.bf16.mxu0 0
      %278 = vmatpush1.bf16.msra.mxu0 0
      %279 = vmatprep.subr.bf16.mxu0 0
      %280 = vmatpush1.bf16.msra.mxu0 0
      %281 = vmatprep.subr.bf16.mxu0 0
      %282 = vmatpush1.bf16.msra.mxu0 0
      %283 = vmatprep.subr.bf16.mxu0 0
      %284 = vmatpush1.bf16.msra.mxu0 0
      %285 = vmatprep.subr.bf16.mxu0 0
      %286 = vmatpush1.bf16.msra.mxu0 0
      %287 = vmatprep.subr.bf16.mxu0 0
      %288 = vmatpush1.bf16.msra.mxu0 0
      %289 = vmatprep.subr.bf16.mxu0 0
      %290 = vmatpush1.bf16.msra.mxu0 0
      %291 = vmatprep.subr.bf16.mxu0 0
      %292 = vmatpush1.bf16.msra.mxu0 0
      %293 = vmatprep.subr.bf16.mxu0 0
      %294 = vmatpush1.bf16.msra.mxu0 0
      %295 = vmatprep.subr.bf16.mxu0 0
      %296 = vmatpush1.bf16.msra.mxu0 0
      %297 = vmatprep.subr.bf16.mxu0 0
      %298 = vmatpush1.bf16.msra.mxu0 0
      %299 = vmatprep.mubr.bf16.mxu0 0
      %300 = vmatmul.mubr.bf16.gmra.mrb[0].mxu0 %v265
      %v301 = vpop.f32.mrb[0].mxu0
      %v302 = vadd.f32 %v256, %v301
      %v303 = vpop.f32.mrb[0].mxu0
      %v304 = vpop.f32.mrb[0].mxu0
      %v305 = vpop.f32.mrb[0].mxu0
      %306 = vdwg.mxu0
      %v307 = vld [vmem:[#allocation9] sm:$0x1]
      %v309 = vlaneseq
      %v310 = vshrl.u32 %v309, 7
      %v311 = vsub.s32 0, %v310
      %v312 = vrot.slane %v307, %v311
      %v314 = vadd.f32 %v302, %v312
      %v315 = vmul.f32 %v314, 0.2
      %v316 = vmax.f32 %v314, %v315
      %vm317 = vcmask 261120
      %v318 = vsel %vm317, %v316, 0.0
      %v319 = vrot.slane %v318, 4
      %v320 = vadd.f32 %v318, %v319
      %v321 = vrot.slane %v320, 2
      %v322 = vadd.f32 %v320, %v321
      %v323 = vrot.slane %v322, 1
      %v324 = vadd.f32 %v322, %v323
      %v325 = vmul.f32 %v324, 0.125
      %v326 = vmul.f32 %v316, %v316
      %v327 = vsel %vm317, %v326, 0.0
      %v328 = vrot.slane %v327, 4
      %v329 = vadd.f32 %v327, %v328
      %v330 = vrot.slane %v329, 2
      %v331 = vadd.f32 %v329, %v330
      %v332 = vrot.slane %v331, 1
      %v333 = vadd.f32 %v331, %v332
      %v334 = vmul.f32 %v333, 0.125
      %v335 = vmul.f32 %v325, %v325
      %v336 = vsub.f32 %v334, %v335
      %v337 = vmax.f32 %v336, 0.0
      %v338 = vld [vmem:[#allocation11] sm:$0x1]
      %v339 = vadd.f32 %v337, 1e-05
      %v340 = vrsqrt.pop %v339
      %v341 = vmul.f32 %v338, %v340
      %v342 = vld [vmem:[#allocation12] sm:$0x1]
      %v343 = vmul.f32 %v325, %v341
      %v344 = vsub.f32 %v342, %v343
      %v346 = vlaneseq
      %v347 = vshrl.u32 %v346, 7
      %v348 = vsub.s32 0, %v347
      %v349 = vrot.slane %v341, %v348
      %v351 = vmul.f32 %v316, %v349
      %v353 = vlaneseq
      %v354 = vshrl.u32 %v353, 7
      %v355 = vsub.s32 0, %v354
      %v356 = vrot.slane %v344, %v355
      %v358 = vadd.f32 %v351, %v356
      %v359 = vpack.c.bf16 %v358, %v358
      %v360 = vld [vmem:[#allocation14] sm:$0xf]
      %v361 = vld [vmem:[#allocation14 + $0x4] sm:$0xf]
      %v362 = vld [vmem:[#allocation14 + $0x8] sm:$0xf]
      %v363 = vld [vmem:[#allocation14 + $0xc] sm:$0xf]
      %v364 = vld [vmem:[#allocation15] sm:$0x1]
      %v366 = vlaneseq
      %v367 = vshrl.u32 %v366, 7
      %v368 = vsub.s32 0, %v367
      %v369 = vrot.slane %v364, %v368
      %v375 = vunpack.c.l.b16 %v360
      %v376 = vunpack.c.l.b16 %v361
      %v377 = vunpack.c.l.b16 %v362
      %v378 = vunpack.c.l.b16 %v363
      %v379 = vpack.c.b16 %v376, %v375
      %v380 = vpack.c.b16 %v378, %v377
      %v384 = vsel %vm317, %v359, 0
      %386 = vmatprep.subr.bf16.mxu0 0
      %387 = vmatpush1.bf16.msra.mxu0 %v379
      %388 = vmatprep.subr.bf16.mxu0 0
      %389 = vmatpush1.bf16.msra.mxu0 %v380
      %390 = vmatprep.subr.bf16.mxu0 0
      %391 = vmatpush1.bf16.msra.mxu0 0
      %392 = vmatprep.subr.bf16.mxu0 0
      %393 = vmatpush1.bf16.msra.mxu0 0
      %394 = vmatprep.subr.bf16.mxu0 0
      %395 = vmatpush1.bf16.msra.mxu0 0
      %396 = vmatprep.subr.bf16.mxu0 0
      %397 = vmatpush1.bf16.msra.mxu0 0
      %398 = vmatprep.subr.bf16.mxu0 0
      %399 = vmatpush1.bf16.msra.mxu0 0
      %400 = vmatprep.subr.bf16.mxu0 0
      %401 = vmatpush1.bf16.msra.mxu0 0
      %402 = vmatprep.subr.bf16.mxu0 0
      %403 = vmatpush1.bf16.msra.mxu0 0
      %404 = vmatprep.subr.bf16.mxu0 0
      %405 = vmatpush1.bf16.msra.mxu0 0
      %406 = vmatprep.subr.bf16.mxu0 0
      %407 = vmatpush1.bf16.msra.mxu0 0
      %408 = vmatprep.subr.bf16.mxu0 0
      %409 = vmatpush1.bf16.msra.mxu0 0
      %410 = vmatprep.subr.bf16.mxu0 0
      %411 = vmatpush1.bf16.msra.mxu0 0
      %412 = vmatprep.subr.bf16.mxu0 0
      %413 = vmatpush1.bf16.msra.mxu0 0
      %414 = vmatprep.subr.bf16.mxu0 0
      %415 = vmatpush1.bf16.msra.mxu0 0
      %416 = vmatprep.subr.bf16.mxu0 0
      %417 = vmatpush1.bf16.msra.mxu0 0
      %418 = vmatprep.mubr.bf16.mxu0 0
      %419 = vmatmul.mubr.bf16.gmra.mrb[0].mxu0 %v384
      %v420 = vpop.f32.mrb[0].mxu0
      %v421 = vadd.f32 %v369, %v420
      %v422 = vpop.f32.mrb[0].mxu0
      %v423 = vpop.f32.mrb[0].mxu0
      %v424 = vpop.f32.mrb[0].mxu0
      %425 = vdwg.mxu0
      %v426 = vmul.f32 %v421, 0.2
      %v427 = vmax.f32 %v421, %v426
      %vm428 = vcmask 523264
      %v429 = vsel %vm428, %v427, 0.0
      %v430 = vrot.slane %v429, 4
      %v431 = vadd.f32 %v429, %v430
      %v432 = vrot.slane %v431, 2
      %v433 = vadd.f32 %v431, %v432
      %v434 = vrot.slane %v433, 1
      %v435 = vadd.f32 %v433, %v434
      %v436 = vmul.f32 %v435, 0.125
      %v437 = vmul.f32 %v427, %v427
      %v438 = vsel %vm428, %v437, 0.0
      %v439 = vrot.slane %v438, 4
      %v440 = vadd.f32 %v438, %v439
      %v441 = vrot.slane %v440, 2
      %v442 = vadd.f32 %v440, %v441
      %v443 = vrot.slane %v442, 1
      %v444 = vadd.f32 %v442, %v443
      %v445 = vmul.f32 %v444, 0.125
      %v446 = vmul.f32 %v436, %v436
      %v447 = vsub.f32 %v445, %v446
      %v448 = vmax.f32 %v447, 0.0
      %v449 = vld [vmem:[#allocation17] sm:$0x1]
      %v450 = vadd.f32 %v448, 1e-05
      %v451 = vrsqrt.pop %v450
      %v452 = vmul.f32 %v449, %v451
      %v453 = vld [vmem:[#allocation18] sm:$0x1]
      %v454 = vmul.f32 %v436, %v452
      %v455 = vsub.f32 %v453, %v454
      %v457 = vlaneseq
      %v458 = vshrl.u32 %v457, 7
      %v459 = vsub.s32 0, %v458
      %v460 = vrot.slane %v452, %v459
      %v462 = vmul.f32 %v427, %v460
      %v464 = vlaneseq
      %v465 = vshrl.u32 %v464, 7
      %v466 = vsub.s32 0, %v465
      %v467 = vrot.slane %v455, %v466
      %v469 = vadd.f32 %v462, %v467
      %v470 = vpack.c.bf16 %v469, %v469
      %v471 = vld [vmem:[#allocation20] sm:$0xf]
      %v472 = vld [vmem:[#allocation20 + $0x4] sm:$0xf]
      %v473 = vld [vmem:[#allocation20 + $0x8] sm:$0xf]
      %v474 = vld [vmem:[#allocation20 + $0xc] sm:$0xf]
      %v475 = vld [vmem:[#allocation20 + $0x10] sm:$0xf]
      %v476 = vld [vmem:[#allocation20 + $0x14] sm:$0xf]
      %v477 = vld [vmem:[#allocation20 + $0x18] sm:$0xf]
      %v478 = vld [vmem:[#allocation20 + $0x1c] sm:$0xf]
      %v479 = vld [vmem:[#allocation21] sm:$0x1]
      %v481 = vlaneseq
      %v482 = vshrl.u32 %v481, 7
      %v483 = vsub.s32 0, %v482
      %v484 = vrot.slane %v479, %v483
      %v494 = vunpack.c.l.b16 %v471
      %v495 = vunpack.c.l.b16 %v472
      %v496 = vunpack.c.l.b16 %v473
      %v497 = vunpack.c.l.b16 %v474
      %v498 = vunpack.c.l.b16 %v475
      %v499 = vunpack.c.l.b16 %v476
      %v500 = vunpack.c.l.b16 %v477
      %v501 = vunpack.c.l.b16 %v478
      %v502 = vpack.c.b16 %v495, %v494
      %v503 = vpack.c.b16 %v497, %v496
      %v504 = vpack.c.b16 %v499, %v498
      %v505 = vpack.c.b16 %v501, %v500
      %v511 = vsel %vm428, %v470, 0
      %513 = vmatprep.subr.bf16.mxu0 0
      %514 = vmatpush1.bf16.msra.mxu0 %v502
      %515 = vmatprep.subr.bf16.mxu0 0
      %516 = vmatpush1.bf16.msra.mxu0 %v503
      %517 = vmatprep.subr.bf16.mxu0 0
      %518 = vmatpush1.bf16.msra.mxu0 %v504
      %519 = vmatprep.subr.bf16.mxu0 0
      %520 = vmatpush1.bf16.msra.mxu0 %v505
      %521 = vmatprep.subr.bf16.mxu0 0
      %522 = vmatpush1.bf16.msra.mxu0 0
      %523 = vmatprep.subr.bf16.mxu0 0
      %524 = vmatpush1.bf16.msra.mxu0 0
      %525 = vmatprep.subr.bf16.mxu0 0
      %526 = vmatpush1.bf16.msra.mxu0 0
      %527 = vmatprep.subr.bf16.mxu0 0
      %528 = vmatpush1.bf16.msra.mxu0 0
      %529 = vmatprep.subr.bf16.mxu0 0
      %530 = vmatpush1.bf16.msra.mxu0 0
      %531 = vmatprep.subr.bf16.mxu0 0
      %532 = vmatpush1.bf16.msra.mxu0 0
      %533 = vmatprep.subr.bf16.mxu0 0
      %534 = vmatpush1.bf16.msra.mxu0 0
      %535 = vmatprep.subr.bf16.mxu0 0
      %536 = vmatpush1.bf16.msra.mxu0 0
      %537 = vmatprep.subr.bf16.mxu0 0
      %538 = vmatpush1.bf16.msra.mxu0 0
      %539 = vmatprep.subr.bf16.mxu0 0
      %540 = vmatpush1.bf16.msra.mxu0 0
      %541 = vmatprep.subr.bf16.mxu0 0
      %542 = vmatpush1.bf16.msra.mxu0 0
      %543 = vmatprep.subr.bf16.mxu0 0
      %544 = vmatpush1.bf16.msra.mxu0 0
      %545 = vmatprep.mubr.bf16.mxu0 0
      %546 = vmatmul.mubr.bf16.gmra.mrb[0].mxu0 %v511
      %v547 = vpop.f32.mrb[0].mxu0
      %v548 = vadd.f32 %v484, %v547
      %v549 = vpop.f32.mrb[0].mxu0
      %v550 = vpop.f32.mrb[0].mxu0
      %v551 = vpop.f32.mrb[0].mxu0
      %552 = vdwg.mxu0
      %v553 = vmul.f32 %v548, 0.2
      %v554 = vmax.f32 %v548, %v553
      %v555 = vrot.slane %v554, 4
      %v556 = vadd.f32 %v554, %v555
      %v557 = vrot.slane %v556, 2
      %v558 = vadd.f32 %v556, %v557
      %v559 = vrot.slane %v558, 1
      %v560 = vadd.f32 %v558, %v559
      %v561 = vmul.f32 %v560, 0.125
      %v562 = vmul.f32 %v554, %v554
      %v563 = vrot.slane %v562, 4
      %v564 = vadd.f32 %v562, %v563
      %v565 = vrot.slane %v564, 2
      %v566 = vadd.f32 %v564, %v565
      %v567 = vrot.slane %v566, 1
      %v568 = vadd.f32 %v566, %v567
      %v569 = vmul.f32 %v568, 0.125
      %v570 = vmul.f32 %v561, %v561
      %v571 = vsub.f32 %v569, %v570
      %v572 = vmax.f32 %v571, 0.0
      %v573 = vld [vmem:[#allocation23] sm:$0x1]
      %v574 = vadd.f32 %v572, 1e-05
      %v575 = vrsqrt.pop %v574
      %v576 = vmul.f32 %v573, %v575
      %v577 = vld [vmem:[#allocation24] sm:$0x1]
      %v578 = vmul.f32 %v561, %v576
      %v579 = vsub.f32 %v577, %v578
      %v581 = vlaneseq
      %v582 = vshrl.u32 %v581, 7
      %v583 = vsub.s32 0, %v582
      %v584 = vrot.slane %v576, %v583
      %v586 = vmul.f32 %v554, %v584
      %v588 = vlaneseq
      %v589 = vshrl.u32 %v588, 7
      %v590 = vsub.s32 0, %v589
      %v591 = vrot.slane %v579, %v590
      %v593 = vadd.f32 %v586, %v591
      %v594 = vpack.c.bf16 %v593, %v593
      %595 = vst [vmem:[#allocation2] sm:$0xf] %v594
    $region133: #{generator_forward.1} parent=1 // pred_fallthru
      _
    %v596 = vld [vmem:[#allocation2] sm:$0xf]
    %v597 = vld [vmem:[#allocation26] sm:$0xf]
    %v598 = vld [vmem:[#allocation26 + $0x4] sm:$0xf]
    %v599 = vld [vmem:[#allocation26 + $0x8] sm:$0xf]
    %v600 = vld [vmem:[#allocation26 + $0xc] sm:$0xf]
    %v601 = vld [vmem:[#allocation26 + $0x10] sm:$0xf]
    %v602 = vld [vmem:[#allocation26 + $0x14] sm:$0xf]
    %v603 = vld [vmem:[#allocation26 + $0x18] sm:$0xf]
    %v604 = vld [vmem:[#allocation26 + $0x1c] sm:$0xf]
    %v605 = vld [vmem:[#allocation26 + $0x20] sm:$0xf]
    %v606 = vld [vmem:[#allocation26 + $0x24] sm:$0xf]
    %v607 = vld [vmem:[#allocation26 + $0x28] sm:$0xf]
    %v608 = vld [vmem:[#allocation26 + $0x2c] sm:$0xf]
    %v609 = vld [vmem:[#allocation26 + $0x30] sm:$0xf]
    %v610 = vld [vmem:[#allocation26 + $0x34] sm:$0xf]
    %v611 = vld [vmem:[#allocation26 + $0x38] sm:$0xf]
    %v612 = vld [vmem:[#allocation26 + $0x3c] sm:$0xf]
    %v613 = vld [vmem:[#allocation27] sm:$0x1]
    %v615 = vlaneseq
    %v616 = vshrl.u32 %v615, 7
    %v617 = vsub.s32 0, %v616
    %v618 = vrot.slane %v613, %v617
    %v636 = vunpack.c.l.b16 %v597
    %v637 = vunpack.c.l.b16 %v598
    %v638 = vunpack.c.l.b16 %v599
    %v639 = vunpack.c.l.b16 %v600
    %v640 = vunpack.c.l.b16 %v601
    %v641 = vunpack.c.l.b16 %v602
    %v642 = vunpack.c.l.b16 %v603
    %v643 = vunpack.c.l.b16 %v604
    %v644 = vunpack.c.l.b16 %v605
    %v645 = vunpack.c.l.b16 %v606
    %v646 = vunpack.c.l.b16 %v607
    %v647 = vunpack.c.l.b16 %v608
    %v648 = vunpack.c.l.b16 %v609
    %v649 = vunpack.c.l.b16 %v610
    %v650 = vunpack.c.l.b16 %v611
    %v651 = vunpack.c.l.b16 %v612
    %v652 = vpack.c.b16 %v637, %v636
    %v653 = vpack.c.b16 %v639, %v638
    %v654 = vpack.c.b16 %v641, %v640
    %v655 = vpack.c.b16 %v643, %v642
    %v656 = vpack.c.b16 %v645, %v644
    %v657 = vpack.c.b16 %v647, %v646
    %v658 = vpack.c.b16 %v649, %v648
    %v659 = vpack.c.b16 %v651, %v650
    %668 = vmatprep.subr.bf16.mxu0 0
    %669 = vmatpush1.bf16.msra.mxu0 %v652
    %670 = vmatprep.subr.bf16.mxu0 0
    %671 = vmatpush1.bf16.msra.mxu0 %v653
    %672 = vmatprep.subr.bf16.mxu0 0
    %673 = vmatpush1.bf16.msra.mxu0 %v654
    %674 = vmatprep.subr.bf16.mxu0 0
    %675 = vmatpush1.bf16.msra.mxu0 %v655
    %676 = vmatprep.subr.bf16.mxu0 0
    %677 = vmatpush1.bf16.msra.mxu0 %v656
    %678 = vmatprep.subr.bf16.mxu0 0
    %679 = vmatpush1.bf16.msra.mxu0 %v657
    %680 = vmatprep.subr.bf16.mxu0 0
    %681 = vmatpush1.bf16.msra.mxu0 %v658
    %682 = vmatprep.subr.bf16.mxu0 0
    %683 = vmatpush1.bf16.msra.mxu0 %v659
    %684 = vmatprep.subr.bf16.mxu0 0
    %685 = vmatpush1.bf16.msra.mxu0 0
    %686 = vmatprep.subr.bf16.mxu0 0
    %687 = vmatpush1.bf16.msra.mxu0 0
    %688 = vmatprep.subr.bf16.mxu0 0
    %689 = vmatpush1.bf16.msra.mxu0 0
    %690 = vmatprep.subr.bf16.mxu0 0
    %691 = vmatpush1.bf16.msra.mxu0 0
    %692 = vmatprep.subr.bf16.mxu0 0
    %693 = vmatpush1.bf16.msra.mxu0 0
    %694 = vmatprep.subr.bf16.mxu0 0
    %695 = vmatpush1.bf16.msra.mxu0 0
    %696 = vmatprep.subr.bf16.mxu0 0
    %697 = vmatpush1.bf16.msra.mxu0 0
    %698 = vmatprep.subr.bf16.mxu0 0
    %699 = vmatpush1.bf16.msra.mxu0 0
    %700 = vmatprep.mubr.bf16.mxu0 0
    %701 = vmatmul.mubr.bf16.gmra.mrb[0].mxu0 %v596
    %v702 = vpop.f32.mrb[0].mxu0
    %v703 = vadd.f32 %v618, %v702
    %v704 = vpop.f32.mrb[0].mxu0
    %v705 = vpop.f32.mrb[0].mxu0
    %v706 = vpop.f32.mrb[0].mxu0
    %707 = vdwg.mxu0
    %v708 = vtanh.pop %v703
    %709 = vst [vmem:[#allocation29] sm:$0xff] %v708
    // Predicated region
    $region134: #{generator_forward.1} parent=1 // pred_check
      _
    $region135: #{generator_forward.1} parent=1 // pred_check_branch
      %711 = sbr.rel (0) target = $region137
    $region136: #{generator_forward.1} parent=1 // pred_region
      %s713 = ssub.s32 128, 128
      %714 = vsyncadd [#allocation5], %s713
      %s716 = sshll.u32 [#allocation29], 4
      %s717 = int_to_ptr.vmem [resolvable:$true] %s716
      %719 = dma.vmem_to_hbm [thread:$0]  %s717, 128, %s16, [#allocation5]
    $region137: #{generator_forward.1} parent=1 // pred_fallthru
      _
    // Predicated region
    $region138: #{generator_forward.1} parent=1 // pred_check
      _
    $region139: #{generator_forward.1} parent=1 // pred_check_branch
      %721 = sbr.rel (0) target = $region141
    $region140: #{generator_forward.1} parent=1 // pred_region
      %722 = dma.done [#allocation5], 128
    $region141: #{generator_forward.1} parent=1 // pred_fallthru
      _
    %723 = vsyncpa [#allocation4], 1
    %724 = vsyncpa [#allocation7], 1
    %725 = vsyncpa [#allocation10], 1
    %726 = vsyncpa [#allocation13], 1
    %727 = vsyncpa [#allocation16], 1
    %728 = vsyncpa [#allocation19], 1
    %729 = vsyncpa [#allocation22], 1
    %730 = vsyncpa [#allocation25], 1
    %731 = vsyncpa [#allocation28], 1
    %732 = vsyncpa [#allocation5], 1

</llo_original>
